<compile_context>
chip_gen: v7x
topology: tpu7x:2x2x1
jax: 0.10.0
libtpu: 0.0.40
codegen_flags: <defaults>
</compile_context>

<pallas_src>
import jax
import jax.numpy as jnp
from jax.experimental import pallas as pl
from jax.experimental.pallas import tpu as pltpu

SCALE_FACTOR = 1.0 / 0.6

_TARGET_TILE_BYTES = 2 * 1024 * 1024   # ~2 MiB per tile
_LANE_WIDTHS = (2048, 1024, 512, 256, 128)


def _scaled_silu_kernel(x_ref, o_ref):
    x = x_ref[...]
    # SiLU(x) = x * sigmoid(x); compute in f32 (no-op for f32 inputs, and
    # v5e's VPU/EUP have no bf16 path anyway). Mem-bound, so this is free.
    xf = x.astype(jnp.float32)
    y = xf * jax.nn.sigmoid(xf) * jnp.float32(SCALE_FACTOR)
    o_ref[...] = y.astype(o_ref.dtype)


def scaled_silu(x: jax.Array) -> jax.Array:
    orig_shape = x.shape
    L = x.size
    if L == 0:
        return x

    flat = x.reshape(-1)

    # Lane-dense column width: largest multiple of 128 (<= 2048) dividing L,
    # so the reshape is a pure bitcast (no HBM copy).
    C = None
    for c in _LANE_WIDTHS:
        if L % c == 0:
            C = c
            break

    pad = 0
    if C is None:
        if L < 128:
            # Tiny input: single short row; block == full array dims (allowed).
            C = L
        else:
            # Rare ragged case: pad the flat array to a multiple of 128.
            pad = (-L) % 128
            flat = jnp.pad(flat, (0, pad))
            C = 128

    M = flat.size // C
    x2 = flat.reshape(M, C)

    # Row-tile sized for ~_TARGET_TILE_BYTES per block; multiple of 8 (sublane
    # rule) unless the whole array is smaller than one tile.
    itemsize = jnp.dtype(x.dtype).itemsize
    rows_target = max(1, _TARGET_TILE_BYTES // (C * itemsize))
    if M <= rows_target:
        tm = M
    else:
        tm = min(M, max(8, (rows_target // 8) * 8))

    grid = (pl.cdiv(M, tm),)   # ragged last block handled by Pallas masking

    out = pl.pallas_call(
        _scaled_silu_kernel,
        out_shape=jax.ShapeDtypeStruct((M, C), x.dtype),
        grid=grid,
        in_specs=[pl.BlockSpec((tm, C), lambda i: (i, 0))],
        out_specs=pl.BlockSpec((tm, C), lambda i: (i, 0)),
        compiler_params=pltpu.CompilerParams(
            dimension_semantics=("parallel",)
        ),
    )(x2)

    out = out.reshape(-1)
    if pad:
        out = out[:L]
    return out.reshape(orig_shape)


if __name__ == "__main__":
    key = jax.random.PRNGKey(0)
    k1, k2 = jax.random.split(key)

    # Typical PaiNN-style input: [num_nodes, hidden] = [8, 32]
    x_a = jax.random.normal(k1, (8, 32), dtype=jnp.float32)
    # N-D input to exercise the flatten-to-lane-dense path.
    x_b = jax.random.normal(k2, (2, 4, 16, 16), dtype=jnp.float32)

    for x in (x_a, x_b):
        y = scaled_silu(x)
        jax.block_until_ready(y)
        y_ref = jax.nn.silu(x) * SCALE_FACTOR
        assert y.shape == x.shape
        assert jnp.allclose(y, y_ref, atol=1e-6, rtol=1e-6), "mismatch vs reference"

    print("KERNEL_OK")
</pallas_src>

<mosaic_0001>
module attributes {stable_mosaic.version = 11 : i64} {
  func.func @_scaled_silu_kernel(%arg0: i32, %arg1: memref<1x256xf32, #tpu.memory_space<vmem>>, %arg2: memref<1x256xf32, #tpu.memory_space<vmem>>) attributes {dimension_semantics = [#tpu.dimension_semantics<parallel>], iteration_bounds = array<i64: 1>, scalar_prefetch = 0 : i64, scratch_operands = 0 : i64, tpu.core_type = #tpu.core_type<tc>, window_params = [{transform_indices = @transform_0, window_bounds = array<i64: 1, 256>}, {transform_indices = @transform_1, window_bounds = array<i64: 1, 256>}]} {
    %c0 = arith.constant 0 : index
    %c0_0 = arith.constant 0 : index
    %0 = vector.load %arg1[%c0, %c0_0] : memref<1x256xf32, #tpu.memory_space<vmem>>, vector<1x256xf32>
    %1 = arith.negf %0 : vector<1x256xf32>
    %2 = math.exp %1 : vector<1x256xf32>
    %cst = arith.constant 1.000000e+00 : f32
    %3 = vector.broadcast %cst : f32 to vector<1x256xf32>
    %4 = arith.addf %3, %2 : vector<1x256xf32>
    %5 = arith.divf %3, %4 : vector<1x256xf32>
    %6 = arith.mulf %0, %5 : vector<1x256xf32>
    %cst_1 = arith.constant 1.66666663 : f32
    %7 = vector.broadcast %cst_1 : f32 to vector<1x256xf32>
    %8 = arith.mulf %6, %7 : vector<1x256xf32>
    %c0_2 = arith.constant 0 : index
    %c0_3 = arith.constant 0 : index
    %9 = vector.load %arg2[%c0_2, %c0_3] : memref<1x256xf32, #tpu.memory_space<vmem>>, vector<1x256xf32>
    tpu.vector_store %arg2[%c0_2, %c0_3], %8 {strides = array<i32>} : memref<1x256xf32, #tpu.memory_space<vmem>>, vector<1x256xf32>,
    return
  }
  func.func @transform_0(%arg0: i32) -> (i32, i32) {
    %c0_i32 = arith.constant 0 : i32
    %c0_i32_0 = arith.constant 0 : i32
    return %arg0, %c0_i32 : i32, i32
  }
  func.func @transform_1(%arg0: i32) -> (i32, i32) {
    %c0_i32 = arith.constant 0 : i32
    %c0_i32_0 = arith.constant 0 : i32
    return %arg0, %c0_i32 : i32, i32
  }
}

</mosaic_0001>

<llo_original>
// kernel: tpu_custom_call.1
$region0: #{tpu_custom_call.1}
  #allocation0 [shape = 'u32[]', space=smem, size = 0x4, offset = 0x4, fixed_abs, tag = 'smem constant byte address 0x4 - core index']
  #allocation1 [shape = 'u32[144,128]{1,0:T(1,128)}', space=vmem, size = 0x12000, scoped, tag = 'internal scratch']
  %s0 = inlined_call_operand.hbm [shape: f32[1,256], index: 0, kind: input, shape index: {}]
  %s1 = inlined_call_operand.hbm [shape: f32[1,256], index: 1, kind: output, shape index: {}]
  %s2 = sld [smem:[#allocation0]]
  $region18: #{tpu_custom_call.1} parent=0
    _
  %s4 = ssub.s32 1, %s2
  %s5 = scalar_select 0, %s4, %s2
  $region1: #{tpu_custom_call.1} parent=0
    #allocation2 [shape = 'u8[1024]{0}', space=vmem, size = 0x400, scoped, tag = 'input window, operand 0, single buffered']
    #allocation3 [shape = 's32[1]{0}', space=sflag, size = 0x4, scoped, tag = 'scoped memory for tpu_custom_call.1']
    #allocation4 [shape = 's32[1]{0}', space=sflag, size = 0x4, scoped, tag = 'scoped memory for tpu_custom_call.1']
    #allocation5 [shape = 'u8[1024]{0}', space=vmem, size = 0x400, scoped, tag = 'output window, operand 0, single buffered']
    %6 = vsyncpa [#allocation3], 0
    %7 = vsyncpa [#allocation4], 0
    // Predicated region
    $region2: #{tpu_custom_call.1} parent=1 // pred_check
      _
    $region3: #{tpu_custom_call.1} parent=1 // pred_check_branch
      %9 = sbr.rel (0) target = $region5
    $region4: #{tpu_custom_call.1} parent=1 // pred_region
      %s11 = ssub.s32 32, 32
      %12 = vsyncadd [#allocation3], %s11
      %s14 = sshll.u32 [#allocation2], 4
      %s15 = int_to_ptr.vmem [resolvable:$true] %s14
      %17 = dma.hbm_to_vmem [thread:$0]  %s0, 32, %s15, [#allocation3]
    $region5: #{tpu_custom_call.1} parent=1 // pred_fallthru
      _
    // Predicated region
    $region6: #{tpu_custom_call.1} parent=1 // pred_check
      _
    $region7: #{tpu_custom_call.1} parent=1 // pred_check_branch
      %19 = sbr.rel (0) target = $region9
    $region8: #{tpu_custom_call.1} parent=1 // pred_region
      %20 = dma.done [#allocation3], 32
    $region9: #{tpu_custom_call.1} parent=1 // pred_fallthru
      _
    %v21 = vld [vmem:[#allocation2] sm:$0x3]
    %v22 = vxor.u32 %v21, 2147483648
    %v23 = vmul.f32 %v22, 1.442695
    %v24 = vpow.pop %v23
    %v25 = vadd.f32 %v24, 1.0
    %v26 = vrcp.pop %v25
    %v27 = vmul.f32 1.0, %v26
    %v28 = vmul.f32 %v21, %v27
    %v29 = vmul.f32 %v28, 1.6666666
    %v30 = vlaneseq
    %vm31 = vcmp.ge.s32.totalorder %v30, 0
    %vm32 = vcmp.lt.s32.totalorder %v30, 256
    %vm33 = vmand %vm31, %vm32
    %34 = vst.msk [vmem:[#allocation5] sm:$0x3] %vm33, %v29
    // Predicated region
    $region10: #{tpu_custom_call.1} parent=1 // pred_check
      _
    $region11: #{tpu_custom_call.1} parent=1 // pred_check_branch
      %36 = sbr.rel (0) target = $region13
    $region12: #{tpu_custom_call.1} parent=1 // pred_region
      %s38 = ssub.s32 32, 32
      %39 = vsyncadd [#allocation4], %s38
      %s41 = sshll.u32 [#allocation5], 4
      %s42 = int_to_ptr.vmem [resolvable:$true] %s41
      %44 = dma.vmem_to_hbm [thread:$0]  %s42, 32, %s1, [#allocation4]
    $region13: #{tpu_custom_call.1} parent=1 // pred_fallthru
      _
    // Predicated region
    $region14: #{tpu_custom_call.1} parent=1 // pred_check
      _
    $region15: #{tpu_custom_call.1} parent=1 // pred_check_branch
      %46 = sbr.rel (0) target = $region17
    $region16: #{tpu_custom_call.1} parent=1 // pred_region
      %47 = dma.done [#allocation4], 32
    $region17: #{tpu_custom_call.1} parent=1 // pred_fallthru
      _
    %48 = vsyncpa [#allocation3], 1
    %49 = vsyncpa [#allocation4], 1

</llo_original>
